<compile_context>
chip_gen: v5e
topology: v5e:2x2
jax: 0.10.0
libtpu: 0.0.40
codegen_flags: <defaults>
</compile_context>

<pallas_src>
import functools
import math

import jax
import jax.numpy as jnp
from jax.experimental import pallas as pl
from jax.experimental.pallas import tpu as pltpu


def make_positional_encoding(d_model: int, max_len: int = 5000,
                             dtype=jnp.float32) -> jnp.ndarray:
    """Buffer construction identical to the PyTorch __init__ (computed in f32),
    stored in the activation dtype so the forward pass never re-casts it."""
    assert d_model % 2 == 0, "d_model must be even (same limitation as PyTorch)"
    position = jnp.arange(0, max_len, dtype=jnp.float32)[:, None]          # (max_len, 1)
    div_term = jnp.exp(jnp.arange(0, d_model, 2, dtype=jnp.float32)
                       * (-math.log(10000.0) / d_model))                   # (d_model/2,)
    angles = position * div_term                                            # (max_len, d_model/2)
    pe = jnp.zeros((max_len, d_model), dtype=jnp.float32)
    pe = pe.at[:, 0::2].set(jnp.sin(angles))
    pe = pe.at[:, 1::2].set(jnp.cos(angles))
    # pe.unsqueeze(0).transpose(0, 1) -> (max_len, 1, d_model)
    return pe[:, None, :].astype(dtype)


def _pe_add_kernel(x_ref, pe_ref, o_ref):
    # (ts, B, td) + (ts, 1, td): pe broadcasts over the batch (sublane) dim.
    o_ref[...] = x_ref[...] + pe_ref[...]


def _pe_add_folded_kernel(x_ref, pe_ref, o_ref, *, batch):
    # x block is (ts, B*D), pe block is (ts, D): replicate pe across the lane
    # dim in VMEM (no HBM-materialized broadcast).
    pe = pe_ref[...]
    if batch > 1:
        pe = jnp.tile(pe, (1, batch))
    o_ref[...] = x_ref[...] + pe


def _vmem_limits():
    """(scoped vmem limit, per-grid-step double-buffered working-set budget)."""
    try:
        cap = int(pltpu.get_tpu_info().vmem_capacity_bytes)
    except Exception:
        cap = 64 * 1024 * 1024      # assume the smallest (v7x per-core) VMEM
    limit = min(int(cap * 0.7), 96 * 1024 * 1024)
    # Pipelined elementwise adds reach ~85% of HBM roofline with a few MiB per
    # buffer; bigger tiles only burn VMEM headroom and grid-step count.
    budget = min(limit // 3, 16 * 1024 * 1024)
    return limit, budget


def _choose_seq_tile(seq_len, per_row_bytes, align, budget_bytes, total_bytes):
    """Largest sequence tile whose double-buffered footprint fits the budget."""
    max_rows = max(1, budget_bytes // max(1, per_row_bytes))
    ts = min(seq_len, max_rows)
    # v7x has 2 TensorCores: once there is enough data to be worth splitting,
    # prefer an even number (>= 2) of grid steps so the "parallel" axis shards
    # cleanly across both cores (no-op on single-TC v5e/v6e).
    if total_bytes >= (4 << 20):
        steps = pl.cdiv(seq_len, ts)
        if steps % 2 == 1:
            steps += 1
        ts = pl.cdiv(seq_len, steps)
    if ts < seq_len:
        ts = max(align, (ts // align) * align)
    return max(1, min(ts, seq_len))


def positional_encoding_forward(x: jnp.ndarray, pe: jnp.ndarray,
                                *, alias_input: bool = True) -> jnp.ndarray:
    """x: (S, B, D), pe: (max_len, 1, D)  ->  (S, B, D)."""
    S, B, D = x.shape
    if S > pe.shape[0]:
        raise ValueError(f"sequence length {S} exceeds pe max_len {pe.shape[0]}")

    itemsize = jnp.dtype(x.dtype).itemsize
    # dtype-aware sublane granularity: 8 (f32), 16 (bf16/f16), 32 (int8/fp8).
    sublane = max(8, 32 // itemsize)

    pe_slice = pe[:S]
    if pe_slice.dtype != x.dtype:
        # Construct pe in the activation dtype (make_positional_encoding(dtype=...))
        # so this cast never runs per-call.
        pe_slice = pe_slice.astype(x.dtype)

    vmem_limit, budget = _vmem_limits()
    total_bytes = (2 * S * B * D + S * D) * itemsize
    io_alias = {0: 0} if alias_input else {}

    dense_3d = (B % sublane == 0) and (D % 128 == 0)

    if not dense_3d:
        # Small / unaligned batch or unaligned d_model: the (B, D) trailing tile
        # of the natural 3-D layout would be sublane- and/or lane-padded (masked
        # vst + wasted DMA bytes).  Fold batch into the lane dim and replicate
        # pe *inside* the kernel -- pe HBM traffic stays S*D, not S*B*D.
        BD = B * D
        x2 = x.reshape(S, BD)
        pe2 = pe_slice.reshape(S, D)
        per_row = 2 * (2 * BD + D) * itemsize       # double-buffered x + out + pe
        ts = _choose_seq_tile(S, per_row, sublane, budget, total_bytes)
        out2 = pl.pallas_call(
            functools.partial(_pe_add_folded_kernel, batch=B),
            out_shape=jax.ShapeDtypeStruct((S, BD), x.dtype),
            grid_spec=pltpu.PrefetchScalarGridSpec(
                num_scalar_prefetch=0,
                grid=(pl.cdiv(S, ts),),
                in_specs=[pl.BlockSpec((ts, BD), lambda i: (i, 0)),
                          pl.BlockSpec((ts, D), lambda i: (i, 0))],
                out_specs=pl.BlockSpec((ts, BD), lambda i: (i, 0)),
            ),
            compiler_params=pltpu.CompilerParams(
                dimension_semantics=("parallel",),
                vmem_limit_bytes=vmem_limit),
            input_output_aliases=io_alias,
        )(x2, pe2)
        return out2.reshape(S, B, D)

    # Dense 3-D path: (ts, B, td) blocks; pe block (ts, 1, td) broadcasts over
    # the batch dim in-kernel.  Tile D as a second "parallel" grid axis only
    # when a single sequence row's double-buffered footprint exceeds the
    # per-step budget (very large B*D), so ts never collapses to tiny values.
    per_row_full = 2 * (2 * B * D + D) * itemsize
    if per_row_full > budget and D > 128:
        td = budget // (2 * (2 * B + 1) * itemsize * 8)   # aim for >= 8 rows/step
        td = int(min(max((td // 128) * 128, 128), D))
    else:
        td = D
    nd = pl.cdiv(D, td)
    per_row = 2 * (2 * B * td + td) * itemsize
    ts = _choose_seq_tile(S, per_row, 1, budget, total_bytes)

    if nd == 1:
        grid = (pl.cdiv(S, ts),)
        in_specs = [pl.BlockSpec((ts, B, D), lambda i: (i, 0, 0)),
                    pl.BlockSpec((ts, 1, D), lambda i: (i, 0, 0))]
        out_specs = pl.BlockSpec((ts, B, D), lambda i: (i, 0, 0))
        dims = ("parallel",)
    else:
        grid = (pl.cdiv(S, ts), nd)
        in_specs = [pl.BlockSpec((ts, B, td), lambda i, j: (i, 0, j)),
                    pl.BlockSpec((ts, 1, td), lambda i, j: (i, 0, j))]
        out_specs = pl.BlockSpec((ts, B, td), lambda i, j: (i, 0, j))
        dims = ("parallel", "parallel")

    return pl.pallas_call(
        _pe_add_kernel,
        out_shape=jax.ShapeDtypeStruct((S, B, D), x.dtype),
        grid_spec=pltpu.PrefetchScalarGridSpec(
            num_scalar_prefetch=0,
            grid=grid,
            in_specs=in_specs,
            out_specs=out_specs,
        ),
        compiler_params=pltpu.CompilerParams(
            dimension_semantics=dims,
            vmem_limit_bytes=vmem_limit),
        input_output_aliases=io_alias,
    )(x, pe_slice)


if __name__ == "__main__":
    # Path 1: folded lane-dense path (small batch, in-kernel pe replication).
    seq_len, batch, d_model = 8, 2, 32
    pe = make_positional_encoding(d_model, max_len=64)
    x = jax.random.normal(jax.random.PRNGKey(0), (seq_len, batch, d_model),
                          dtype=jnp.float32)
    out = jax.block_until_ready(positional_encoding_forward(x, pe))
    ref = x + pe[:seq_len]
    assert out.shape == x.shape
    assert jnp.allclose(out, ref, atol=1e-6), "mismatch (folded f32 path)"

    # Path 2: dense 3-D path (B multiple of the f32 sublane count, D % 128 == 0).
    s2, b2, d2 = 16, 8, 128
    pe2 = make_positional_encoding(d2, max_len=32)
    x2 = jax.random.normal(jax.random.PRNGKey(1), (s2, b2, d2), dtype=jnp.float32)
    out2 = jax.block_until_ready(positional_encoding_forward(x2, pe2))
    assert jnp.allclose(out2, x2 + pe2[:s2], atol=1e-6), "mismatch (dense 3-D path)"

    # Path 3: bf16 dtype-aware routing -- B=8 is NOT a multiple of the bf16
    # sublane count (16), so this exercises the folded path with a pre-cast
    # bf16 pe buffer (no per-call cast).
    s3, b3, d3 = 16, 8, 128
    pe3 = make_positional_encoding(d3, max_len=32, dtype=jnp.bfloat16)
    x3 = jax.random.normal(jax.random.PRNGKey(2), (s3, b3, d3), dtype=jnp.bfloat16)
    out3 = jax.block_until_ready(positional_encoding_forward(x3, pe3))
    ref3 = x3 + pe3[:s3]
    assert jnp.allclose(out3.astype(jnp.float32), ref3.astype(jnp.float32),
                        atol=2e-2), "mismatch (folded bf16 path)"

    print("KERNEL_OK")
</pallas_src>

<mosaic_0001>
module attributes {stable_mosaic.version = 11 : i64} {
  func.func @_pe_add_folded_kernel(%arg0: i32, %arg1: memref<8x64xf32, #tpu.memory_space<vmem>>, %arg2: memref<8x32xf32, #tpu.memory_space<vmem>>, %arg3: memref<8x64xf32, #tpu.memory_space<vmem>>) attributes {dimension_semantics = [#tpu.dimension_semantics<parallel>], iteration_bounds = array<i64: 1>, scalar_prefetch = 0 : i64, scratch_operands = 0 : i64, tpu.core_type = #tpu.core_type<tc>, window_params = [{transform_indices = @transform_0, window_bounds = array<i64: 8, 64>}, {transform_indices = @transform_1, window_bounds = array<i64: 8, 32>}, {transform_indices = @transform_2, window_bounds = array<i64: 8, 64>}]} {
    %c0 = arith.constant 0 : index
    %c0_0 = arith.constant 0 : index
    %0 = vector.load %arg2[%c0, %c0_0] : memref<8x32xf32, #tpu.memory_space<vmem>>, vector<8x32xf32>
    %1 = tpu.concatenate %0, %0 in 1 : vector<8x32xf32>, vector<8x32xf32> -> vector<8x64xf32>
    %c0_1 = arith.constant 0 : index
    %c0_2 = arith.constant 0 : index
    %2 = vector.load %arg1[%c0_1, %c0_2] : memref<8x64xf32, #tpu.memory_space<vmem>>, vector<8x64xf32>
    %3 = arith.addf %2, %1 : vector<8x64xf32>
    %c0_3 = arith.constant 0 : index
    %c0_4 = arith.constant 0 : index
    %4 = vector.load %arg3[%c0_3, %c0_4] : memref<8x64xf32, #tpu.memory_space<vmem>>, vector<8x64xf32>
    tpu.vector_store %arg3[%c0_3, %c0_4], %3 {strides = array<i32>} : memref<8x64xf32, #tpu.memory_space<vmem>>, vector<8x64xf32>,
    return
  }
  func.func @transform_0(%arg0: i32) -> (i32, i32) {
    %c0_i32 = arith.constant 0 : i32
    %c0_i32_0 = arith.constant 0 : i32
    return %arg0, %c0_i32 : i32, i32
  }
  func.func @transform_1(%arg0: i32) -> (i32, i32) {
    %c0_i32 = arith.constant 0 : i32
    %c0_i32_0 = arith.constant 0 : i32
    return %arg0, %c0_i32 : i32, i32
  }
  func.func @transform_2(%arg0: i32) -> (i32, i32) {
    %c0_i32 = arith.constant 0 : i32
    %c0_i32_0 = arith.constant 0 : i32
    return %arg0, %c0_i32 : i32, i32
  }
}

</mosaic_0001>

<llo_original>
// kernel: tpu_custom_call.1
$region0: #{tpu_custom_call.1}
  #allocation0 [shape = 'u32[]', space=smem, size = 0x4, offset = 0x4, fixed_abs, tag = 'smem constant byte address 0x4 - core index']
  #allocation1 [shape = 'u32[72,128]{1,0:T(1,128)}', space=vmem, size = 0x9000, scoped, tag = 'internal scratch']
  %s0 = inlined_call_operand.hbm [shape: f32[8,64], index: 0, kind: input, shape index: {}, may-alias: {0,2}]
  %s1 = inlined_call_operand.vmem [shape: f32[8,32], index: 1, kind: input, shape index: {}]
  %s2 = inlined_call_operand.hbm [shape: f32[8,64], index: 2, kind: output, shape index: {}, may-alias: {0,2}]
  %s3 = sld [smem:[#allocation0]]
  $region22: #{tpu_custom_call.1} parent=0
    _
  %s5 = ssub.s32 1, %s3
  %s6 = scalar_select 0, %s5, %s3
  $region1: #{tpu_custom_call.1} parent=0
    #allocation2 [shape = 'u8[4096]{0}', space=vmem, size = 0x1000, scoped, tag = 'input window, operand 0, single buffered']
    #allocation3 [shape = 's32[1]{0}', space=sflag, size = 0x4, scoped, tag = 'scoped memory for tpu_custom_call.1']
    #allocation4 [shape = 's32[1]{0}', space=sflag, size = 0x4, scoped, tag = 'scoped memory for tpu_custom_call.1']
    #allocation5 [shape = 'u8[4096]{0}', space=vmem, size = 0x1000, scoped, tag = 'output window, operand 0, single buffered']
    %7 = vsyncpa [#allocation3], 0
    %8 = vsyncpa [#allocation4], 0
    // Predicated region
    $region2: #{tpu_custom_call.1} parent=1 // pred_check
      _
    $region3: #{tpu_custom_call.1} parent=1 // pred_check_branch
      %10 = sbr.rel (0) target = $region5
    $region4: #{tpu_custom_call.1} parent=1 // pred_region
      %12 = vsyncadd [#allocation3], 0
      %s14 = sshll.u32 %s0, 4
      %s15 = int_to_ptr.hbm [resolvable:$true] %s14
      %s16 = sshll.u32 [#allocation2], 4
      %s17 = int_to_ptr.vmem [resolvable:$true] %s16
      %19 = dma.hbm_to_vmem [thread:$0]  %s15, 128, %s17, [#allocation3]
    $region5: #{tpu_custom_call.1} parent=1 // pred_fallthru
      _
    // Predicated region
    $region6: #{tpu_custom_call.1} parent=1 // pred_check
      _
    $region7: #{tpu_custom_call.1} parent=1 // pred_check_branch
      %21 = sbr.rel (0) target = $region9
    $region8: #{tpu_custom_call.1} parent=1 // pred_region
      _
    $region9: #{tpu_custom_call.1} parent=1 // pred_fallthru
      _
    // Predicated region
    $region10: #{tpu_custom_call.1} parent=1 // pred_check
      _
    $region11: #{tpu_custom_call.1} parent=1 // pred_check_branch
      %23 = sbr.rel (0) target = $region13
    $region12: #{tpu_custom_call.1} parent=1 // pred_region
      %25 = dma.done [#allocation3], 128
    $region13: #{tpu_custom_call.1} parent=1 // pred_fallthru
      _
    %v26 = vld [vmem:[%s1] sm:$0xff]
    %28 = vrot.lane.b32.xlu0 %v26, 32
    %v29 = vpop.permute.xlu0 %28
    %vm31 = vcmask 261120
    %v32 = vsel %vm31, %v26, %v29
    %v33 = vld [vmem:[#allocation2] sm:$0xff]
    %v34 = vadd.f32 %v33, %v32
    %vm35 = vcmask 523264
    %36 = vst.msk [vmem:[#allocation5] sm:$0xff] %vm35, %v34
    // Predicated region
    $region14: #{tpu_custom_call.1} parent=1 // pred_check
      _
    $region15: #{tpu_custom_call.1} parent=1 // pred_check_branch
      %38 = sbr.rel (0) target = $region17
    $region16: #{tpu_custom_call.1} parent=1 // pred_region
      %40 = vsyncadd [#allocation4], 0
      %s42 = sshll.u32 [#allocation5], 4
      %s43 = int_to_ptr.vmem [resolvable:$true] %s42
      %s44 = sshll.u32 %s2, 4
      %s45 = int_to_ptr.hbm [resolvable:$true] %s44
      %47 = dma.vmem_to_hbm [thread:$0]  %s43, 128, %s45, [#allocation4]
    $region17: #{tpu_custom_call.1} parent=1 // pred_fallthru
      _
    // Predicated region
    $region18: #{tpu_custom_call.1} parent=1 // pred_check
      _
    $region19: #{tpu_custom_call.1} parent=1 // pred_check_branch
      %49 = sbr.rel (0) target = $region21
    $region20: #{tpu_custom_call.1} parent=1 // pred_region
      %51 = dma.done [#allocation4], 128
    $region21: #{tpu_custom_call.1} parent=1 // pred_fallthru
      _
    %52 = vsyncpa [#allocation3], 1
    %53 = vsyncpa [#allocation4], 1

</llo_original>
